<compile_context>
chip_gen: v7x
topology: tpu7x:2x2x1
jax: 0.10.0
libtpu: 0.0.40
codegen_flags: <defaults>
</compile_context>

<pallas_src>
import jax
import jax.numpy as jnp
from jax.experimental import pallas as pl
from jax.experimental.pallas import tpu as pltpu


# --------------------------------------------------------------- kernels ----

def _mprelu_rowweight_kernel(x_ref, w_ref, o_ref):
    """Per-row (per-channel) weight: w_ref is a (TR, 1) f32 column."""
    x = x_ref[...]                      # (TR, LT)
    w = w_ref[...]                      # (TR, 1) -> broadcasts over lanes
    y = w * x                           # promotes to f32 if x is low precision
    o_ref[...] = jnp.where(x > 0, y.astype(x.dtype), x)


def _mprelu_scalar_kernel(w_ref, x_ref, o_ref):
    """Single shared weight: w_ref is a (1,) f32 scalar in SMEM."""
    x = x_ref[...]                      # (TR, LT)
    w = w_ref[0]
    y = w * x
    o_ref[...] = jnp.where(x > 0, y.astype(x.dtype), x)


# ---------------------------------------------------------- tiling policy ----

_TARGET_TILE_BYTES = 8 * 1024 * 1024   # ~2.5 us of DMA even at v7x's 3.2 TB/s
_VMEM_CAP_BYTES = 48 * 1024 * 1024     # headroom inside v7x's 64 MiB VMEM


def _cdiv(a: int, b: int) -> int:
    return -(-a // b)


def _round_up(a: int, b: int) -> int:
    return _cdiv(a, b) * b


def _sublane_pack(dsize: int) -> int:
    # Rows per packed sublane group: 8 (f32), 16 (bf16/f16), 32 (int8/fp8).
    return max(1, 4 // dsize) * 8


def _pick_lane_tile(L: int, dsize: int, pack: int) -> int:
    """Lane-tile width: full extent if it fits, else a multiple of 128."""
    lt_max = max(128, (_TARGET_TILE_BYTES // (pack * dsize)) // 128 * 128)
    if L <= lt_max:
        return L                        # full-extent lane dim (legal even if ragged)
    for lt in range(lt_max, 127, -128): # prefer an exact split (no masked tail block)
        if L % lt == 0:
            return lt
    return lt_max                       # tail lane block handled by Pallas masking


def _pick_row_tile(R: int, LT: int, dsize: int, pack: int, n_lane_tiles: int) -> int:
    """Row-tile height: multiple of the sublane pack, sized to the VMEM target."""
    tr = max(pack, (_TARGET_TILE_BYTES // (LT * dsize)) // pack * pack)
    if tr >= R:
        # Whole row range fits one tile: still split in two for v7x's two
        # TensorCores when there is enough work and no lane-axis parallelism.
        if n_lane_tiles == 1 and R >= 2 * pack:
            return _round_up(_cdiv(R, 2), pack)
        return R                        # full extent (always legal)
    if n_lane_tiles == 1:
        n = _cdiv(R, tr)
        if n % 2 == 1 and n <= 8 and R > pack:
            # Small odd grids leave one v7x core with an extra tile; even it out.
            tr = max(pack, _round_up(_cdiv(R, n + 1), pack))
    return tr


# ----------------------------------------------------------------- launch ----

def _launch_2d(x2d: jax.Array, weight: jax.Array, *, per_row: bool,
               donate_x: bool) -> jax.Array:
    R, L = x2d.shape
    dtype = x2d.dtype
    dsize = dtype.itemsize
    pack = _sublane_pack(dsize)

    LT = _pick_lane_tile(L, dsize, pack)
    n_lane = _cdiv(L, LT)
    TR = _pick_row_tile(R, LT, dsize, pack, n_lane)
    n_row = _cdiv(R, TR)

    tile_bytes = TR * LT * dsize
    # x + out tiles, each double-buffered, plus weight column / scratch slack.
    vmem_limit = int(min(_VMEM_CAP_BYTES,
                         max(16 * 1024 * 1024, 4 * tile_bytes + (2 << 20))))

    cparams = pltpu.CompilerParams(
        dimension_semantics=("parallel", "parallel"),
        vmem_limit_bytes=vmem_limit,
    )

    x_spec = pl.BlockSpec((TR, LT), lambda i, j: (i, j))
    o_spec = pl.BlockSpec((TR, LT), lambda i, j: (i, j))
    out_shape = jax.ShapeDtypeStruct((R, L), dtype)
    grid = (n_row, n_lane)

    if per_row:
        # weight: (R, 1) float32 column, one value per row (channel).
        return pl.pallas_call(
            _mprelu_rowweight_kernel,
            out_shape=out_shape,
            grid=grid,
            in_specs=[x_spec, pl.BlockSpec((TR, 1), lambda i, j: (i, 0))],
            out_specs=o_spec,
            compiler_params=cparams,
            input_output_aliases=({0: 0} if donate_x else {}),
        )(x2d, weight)
    else:
        # weight: (1,) float32 scalar living in SMEM.
        return pl.pallas_call(
            _mprelu_scalar_kernel,
            out_shape=out_shape,
            grid=grid,
            in_specs=[pl.BlockSpec(memory_space=pltpu.MemorySpace.SMEM), x_spec],
            out_specs=o_spec,
            compiler_params=cparams,
            input_output_aliases=({1: 0} if donate_x else {}),
        )(weight, x2d)


def mprelu(x_nchw: jax.Array, weight: jax.Array, *, donate_x: bool = False) -> jax.Array:
    """MPReLU forward: y = -prelu(-x, weight) = where(x > 0, w * x, x).

    x_nchw: (N, C, H, W); weight: (num_parameters,), num_parameters in {1, C}.
    donate_x: alias the output onto x's HBM buffer (caller must allow reuse).
    """
    N, C, H, W = x_nchw.shape
    L = H * W
    num_params = weight.shape[0]
    w32 = weight.astype(jnp.float32)

    if num_params == 1:
        # Shared weight: the channel structure is irrelevant, so pick the most
        # lane-dense 2-D view of the contiguous tensor (reshape is free).
        total = N * C * L
        rows, lanes = N * C, L
        if L % 128 != 0 and total % 128 == 0:
            for cand in (2048, 1024, 512, 256, 128):
                if total % cand == 0:
                    rows, lanes = total // cand, cand
                    break
        x2d = x_nchw.reshape(rows, lanes)
        out2d = _launch_2d(x2d, w32.reshape(1), per_row=False, donate_x=donate_x)
    else:
        assert num_params == C, "num_parameters must be 1 or C"
        x2d = x_nchw.reshape(N * C, L)          # free reshape; row r -> channel r % C
        w_rows = jnp.tile(w32.reshape(C, 1), (N, 1))
        out2d = _launch_2d(x2d, w_rows, per_row=True, donate_x=donate_x)

    return out2d.reshape(N, C, H, W)


# ------------------------------------------------------------------- test ----

if __name__ == "__main__":
    key = jax.random.PRNGKey(0)
    init = 0.25

    def ref_mprelu(x, w):
        C = x.shape[1]
        wb = jnp.reshape(w, (1, -1, 1, 1)) if w.shape[0] == C else w[0]
        return jnp.where(x > 0, wb * x, x)          # == -prelu(-x, w)

    # --- per-channel weight (num_parameters = C), lane-friendly spatial -----
    N, C, H, W = 2, 4, 16, 16
    x = jax.random.normal(key, (N, C, H, W), dtype=jnp.float32)
    w_c = jnp.full((C,), init, dtype=jnp.float32)   # torch.Tensor(C).fill_(0.25)
    y = jax.block_until_ready(mprelu(x, w_c))
    assert jnp.allclose(y, ref_mprelu(x, w_c), atol=1e-6), "per-channel mismatch"

    # --- single shared weight (num_parameters = 1), SMEM scalar -------------
    w_1 = jnp.full((1,), init, dtype=jnp.float32)
    y = jax.block_until_ready(mprelu(x, w_1))
    assert jnp.allclose(y, ref_mprelu(x, w_1), atol=1e-6), "shared-weight mismatch"

    # --- ragged spatial dim (H*W % 128 != 0): handled in-kernel, no pad -----
    x_r = jax.random.normal(jax.random.PRNGKey(1), (2, 4, 5, 5), dtype=jnp.float32)
    y = jax.block_until_ready(mprelu(x_r, w_c))
    assert jnp.allclose(y, ref_mprelu(x_r, w_c), atol=1e-6), "ragged mismatch"

    # --- multi-tile grid (rows split across TensorCores) --------------------
    x_b = jax.random.normal(jax.random.PRNGKey(2), (8, 4, 16, 16), dtype=jnp.float32)
    y = jax.block_until_ready(mprelu(x_b, w_c))
    assert jnp.allclose(y, ref_mprelu(x_b, w_c), atol=1e-6), "multi-tile mismatch"

    # --- output aliased onto x's buffer (optional in-place form) ------------
    y = jax.block_until_ready(mprelu(x, w_1, donate_x=True))
    assert jnp.allclose(y, ref_mprelu(x, w_1), atol=1e-6), "aliased mismatch"

    print("KERNEL_OK")
</pallas_src>

<mosaic_0001>
module attributes {stable_mosaic.version = 11 : i64} {
  func.func @_mprelu_rowweight_kernel(%arg0: i32, %arg1: i32, %arg2: memref<8x256xf32, #tpu.memory_space<vmem>>, %arg3: memref<8x1xf32, #tpu.memory_space<vmem>>, %arg4: memref<8x256xf32, #tpu.memory_space<vmem>>) attributes {dimension_semantics = [#tpu.dimension_semantics<parallel>, #tpu.dimension_semantics<parallel>], iteration_bounds = array<i64: 1, 1>, scalar_prefetch = 0 : i64, scratch_operands = 0 : i64, tpu.core_type = #tpu.core_type<tc>, window_params = [{transform_indices = @transform_0, window_bounds = array<i64: 8, 256>}, {transform_indices = @transform_1, window_bounds = array<i64: 8, 1>}, {transform_indices = @transform_2, window_bounds = array<i64: 8, 256>}]} {
    %c0 = arith.constant 0 : index
    %c0_0 = arith.constant 0 : index
    %0 = vector.load %arg2[%c0, %c0_0] : memref<8x256xf32, #tpu.memory_space<vmem>>, vector<8x256xf32>
    %c0_1 = arith.constant 0 : index
    %c0_2 = arith.constant 0 : index
    %1 = vector.load %arg3[%c0_1, %c0_2] : memref<8x1xf32, #tpu.memory_space<vmem>>, vector<8x1xf32>
    %2 = vector.broadcast %1 : vector<8x1xf32> to vector<8x256xf32>
    %3 = arith.mulf %2, %0 : vector<8x256xf32>
    %cst = arith.constant 0.000000e+00 : f32
    %4 = vector.broadcast %cst : f32 to vector<8x256xf32>
    %5 = arith.cmpf ogt, %0, %4 : vector<8x256xf32>
    %6 = arith.select %5, %3, %0 : vector<8x256xi1>, vector<8x256xf32>
    %c0_3 = arith.constant 0 : index
    %c0_4 = arith.constant 0 : index
    %7 = vector.load %arg4[%c0_3, %c0_4] : memref<8x256xf32, #tpu.memory_space<vmem>>, vector<8x256xf32>
    tpu.vector_store %arg4[%c0_3, %c0_4], %6 {strides = array<i32>} : memref<8x256xf32, #tpu.memory_space<vmem>>, vector<8x256xf32>,
    return
  }
  func.func @transform_0(%arg0: i32, %arg1: i32) -> (i32, i32) {
    %c0_i32 = arith.constant 0 : i32
    return %arg0, %arg1 : i32, i32
  }
  func.func @transform_1(%arg0: i32, %arg1: i32) -> (i32, i32) {
    %c0_i32 = arith.constant 0 : i32
    %c0_i32_0 = arith.constant 0 : i32
    return %arg0, %c0_i32 : i32, i32
  }
  func.func @transform_2(%arg0: i32, %arg1: i32) -> (i32, i32) {
    %c0_i32 = arith.constant 0 : i32
    return %arg0, %arg1 : i32, i32
  }
}

</mosaic_0001>

<llo_original>
// kernel: tpu_custom_call.1
$region0: #{tpu_custom_call.1}
  #allocation0 [shape = 'u32[]', space=smem, size = 0x4, offset = 0x4, fixed_abs, tag = 'smem constant byte address 0x4 - core index']
  #allocation1 [shape = 'u32[144,128]{1,0:T(1,128)}', space=vmem, size = 0x12000, scoped, tag = 'internal scratch']
  %s0 = inlined_call_operand.hbm [shape: f32[8,256], index: 0, kind: input, shape index: {}]
  %s1 = inlined_call_operand.vmem [shape: f32[8,1], index: 1, kind: input, shape index: {}]
  %s2 = inlined_call_operand.hbm [shape: f32[8,256], index: 2, kind: output, shape index: {}]
  %s3 = sld [smem:[#allocation0]]
  $region22: #{tpu_custom_call.1} parent=0
    _
  %s5 = ssub.s32 1, %s3
  %s6 = scalar_select 0, %s5, %s3
  $region1: #{tpu_custom_call.1} parent=0
    #allocation2 [shape = 'u8[8192]{0}', space=vmem, size = 0x2000, scoped, tag = 'input window, operand 0, single buffered']
    #allocation3 [shape = 's32[1]{0}', space=sflag, size = 0x4, scoped, tag = 'scoped memory for tpu_custom_call.1']
    #allocation4 [shape = 's32[1]{0}', space=sflag, size = 0x4, scoped, tag = 'scoped memory for tpu_custom_call.1']
    #allocation5 [shape = 'u8[8192]{0}', space=vmem, size = 0x2000, scoped, tag = 'output window, operand 0, single buffered']
    %7 = vsyncpa [#allocation3], 0
    %8 = vsyncpa [#allocation4], 0
    // Predicated region
    $region2: #{tpu_custom_call.1} parent=1 // pred_check
      _
    $region3: #{tpu_custom_call.1} parent=1 // pred_check_branch
      %10 = sbr.rel (0) target = $region5
    $region4: #{tpu_custom_call.1} parent=1 // pred_region
      %s12 = ssub.s32 256, 256
      %13 = vsyncadd [#allocation3], %s12
      %s15 = sshll.u32 [#allocation2], 4
      %s16 = int_to_ptr.vmem [resolvable:$true] %s15
      %18 = dma.hbm_to_vmem [thread:$0]  %s0, 256, %s16, [#allocation3]
    $region5: #{tpu_custom_call.1} parent=1 // pred_fallthru
      _
    // Predicated region
    $region6: #{tpu_custom_call.1} parent=1 // pred_check
      _
    $region7: #{tpu_custom_call.1} parent=1 // pred_check_branch
      %20 = sbr.rel (0) target = $region9
    $region8: #{tpu_custom_call.1} parent=1 // pred_region
      _
    $region9: #{tpu_custom_call.1} parent=1 // pred_fallthru
      _
    // Predicated region
    $region10: #{tpu_custom_call.1} parent=1 // pred_check
      _
    $region11: #{tpu_custom_call.1} parent=1 // pred_check_branch
      %22 = sbr.rel (0) target = $region13
    $region12: #{tpu_custom_call.1} parent=1 // pred_region
      %23 = dma.done [#allocation3], 256
    $region13: #{tpu_custom_call.1} parent=1 // pred_fallthru
      _
    %v24 = vld [vmem:[#allocation2] sm:$0xff]
    %v25 = vld [vmem:[#allocation2 + $0x8] sm:$0xff]
    %v26 = vld [vmem:[%s1] sm:$0xff]
    %28 = vset.pattern.permute.xlu0 0
    %29 = vperm.xlu0 %28, %v26
    %v30 = vpop.permute.xlu0 %29
    %v32 = vmul.f32 %v30, %v24
    %v33 = vmul.f32 %v30, %v25
    %vm34 = vcmp.gt.f32.partialorder %v24, 0.0
    %vm35 = vcmp.gt.f32.partialorder %v25, 0.0
    %v36 = vsel %vm34, %v32, %v24
    %v37 = vsel %vm35, %v33, %v25
    %38 = vst [vmem:[#allocation5] sm:$0xff] %v36
    %39 = vst [vmem:[#allocation5 + $0x8] sm:$0xff] %v37
    // Predicated region
    $region14: #{tpu_custom_call.1} parent=1 // pred_check
      _
    $region15: #{tpu_custom_call.1} parent=1 // pred_check_branch
      %41 = sbr.rel (0) target = $region17
    $region16: #{tpu_custom_call.1} parent=1 // pred_region
      %s43 = ssub.s32 256, 256
      %44 = vsyncadd [#allocation4], %s43
      %s46 = sshll.u32 [#allocation5], 4
      %s47 = int_to_ptr.vmem [resolvable:$true] %s46
      %49 = dma.vmem_to_hbm [thread:$0]  %s47, 256, %s2, [#allocation4]
    $region17: #{tpu_custom_call.1} parent=1 // pred_fallthru
      _
    // Predicated region
    $region18: #{tpu_custom_call.1} parent=1 // pred_check
      _
    $region19: #{tpu_custom_call.1} parent=1 // pred_check_branch
      %51 = sbr.rel (0) target = $region21
    $region20: #{tpu_custom_call.1} parent=1 // pred_region
      %52 = dma.done [#allocation4], 256
    $region21: #{tpu_custom_call.1} parent=1 // pred_fallthru
      _
    %53 = vsyncpa [#allocation3], 1
    %54 = vsyncpa [#allocation4], 1

</llo_original>
